<compile_context>
chip_gen: v7x
topology: tpu7x:2x2x1
jax: 0.10.0
libtpu: 0.0.40
codegen_flags: <defaults>
</compile_context>

<pallas_src>
import functools

import jax
import jax.numpy as jnp
from jax.experimental import pallas as pl
from jax.experimental.pallas import tpu as pltpu


def _divisors_desc(n):
    return [d for d in range(n, 0, -1) if n % d == 0]


def _pad_up(x, m):
    return ((x + m - 1) // m) * m


def _choose_tiles(batch, num_neg, em_size, *, neg_budget_bytes=16 << 20):
    """Pick (tb, tn): batch-lane tile and negatives-per-grid-step.

    Batch: keep the whole batch in one tile (single-TC v5e/v6e gain nothing
    from splitting); only very large 128-aligned batches are split into an
    EVEN number of >=1024-lane tiles so both v7x TensorCores get work.
    Negatives: as many per step as fit a double-buffered VMEM slab budget.
    """
    tb = batch
    if batch % 128 == 0 and batch >= 2048:
        for d in _divisors_desc(batch):
            if d % 128 == 0 and d >= 1024 and d < batch and (batch // d) % 2 == 0:
                tb = d
                break

    lane_bytes = _pad_up(tb, 128) * 2                     # bf16, padded lanes

    def slab_bytes(tn):                                   # double-buffered neg slab
        return 2 * tn * (2 * em_size) * lane_bytes

    tn = 1
    for d in _divisors_desc(num_neg):
        if slab_bytes(d) <= neg_budget_bytes:
            tn = d
            break
    return tb, tn


def _vmem_footprint_bytes(em_size, num_heads, tb, tn, neg_bufs):
    """Rough padded VMEM footprint of the kernel (to right-size the limit)."""
    lanes = _pad_up(tb, 128)
    f32, bf16, i32 = 4, 2, 4
    total = 0
    total += 2 * _pad_up(2 * em_size, 8) * lanes * bf16                     # ev (2 bufs)
    total += neg_bufs * tn * _pad_up(2 * em_size, 8) * lanes * bf16         # neg slab
    total += 2 * 8 * lanes * i32                                            # head-index row
    total += 2 * 2 * 8 * lanes * f32                                        # 2 outputs
    total += _pad_up(2 * num_heads, 8) * _pad_up(2 * em_size, 128) * bf16   # W2
    total += 3 * _pad_up(2 * num_heads * max(tn, 1), 8) * 128 * f32         # bias/psi/1psi
    total += _pad_up(2 * num_heads, 8) * lanes * f32                        # base scratch
    return total


def dynemb_kernel(ev_ref, neg_ref, w2_ref, bias2_ref, psi_ref, inv_psi_ref,
                  kidx_ref, intent_ref, surv_ref, base_ref,
                  *, num_heads, neg_per_step, num_neg):
    """One grid step = (batch tile i, negative chunk n).

    Block shapes (lanes = batch, so VPU/EUP work and stores are lane-dense):
      ev_ref    : (2E, TB)      bf16   [v1; v2] event embeddings
      neg_ref   : (TN, 2E, TB)  bf16   stacked [neg1_j; neg2_j] negative slabs
      w2_ref    : (2K, 2E)      bf16   block-diag(w_a, w_b)
      bias2_ref : (2K, 1)       f32    [bias; bias]
      psi_ref, inv_psi_ref : (2K*TN, 1) f32  psi / 1/psi tiled to packed rows
      kidx_ref  : (1, TB)       int32  per-event dynamics-head index
      intent_ref, surv_ref : (1, TB) f32  lane-dense outputs
      base_ref  : (2K, TB)      f32    VMEM scratch caching [wb·v2+b ; wa·v1+b]
    """
    n = pl.program_id(1)
    K = num_heads

    w2 = w2_ref[...]
    psi_pack = psi_ref[...]
    inv_psi_pack = inv_psi_ref[...]      # hoisted reciprocal: no divides in hot path

    def scaled_softplus(s, psi, inv_psi):
        # psi * softplus(s / psi), overflow-safe (assumes psi > 0, as in the module).
        x = s * inv_psi
        return psi * (jnp.maximum(x, 0.0) + jnp.log(1.0 + jnp.exp(-jnp.abs(x))))

    @pl.when(n == 0)
    def _init():
        bias2 = bias2_ref[...]                                         # (2K, 1)
        # One fused event dot: W2 @ [v1; v2] = [wa·v1 ; wb·v2]
        base = jnp.dot(w2, ev_ref[...], preferred_element_type=jnp.float32)
        sa, sb = base[:K], base[K:]
        ev_sp = scaled_softplus(sa + sb + bias2[:K],
                                psi_pack[:K], inv_psi_pack[:K])        # (K, TB)
        rows = jax.lax.broadcasted_iota(jnp.int32, ev_sp.shape, 0)
        mask = rows == kidx_ref[...]                                   # (K, TB)
        intent_ref[...] = jnp.sum(jnp.where(mask, ev_sp, 0.0),
                                  axis=0, keepdims=True)
        # Negatives' dot yields [wa·neg1 ; wb·neg2] -> pair it with [sb ; sa] + bias.
        base_ref[...] = jnp.concatenate([sb, sa], axis=0) + bias2
        surv_ref[...] = jnp.zeros_like(surv_ref)

    # Survival contribution of this chunk: one block-diagonal MXU dot per
    # negative, all scores packed along sublanes for a single wide softplus.
    base = base_ref[...]                                               # (2K, TB)
    dots = [jnp.dot(w2, neg_ref[j], preferred_element_type=jnp.float32) + base
            for j in range(neg_per_step)]                              # (2K, TB) each
    scores = jnp.concatenate(dots, axis=0) if neg_per_step > 1 else dots[0]
    terms = scaled_softplus(scores, psi_pack, inv_psi_pack)            # (2K*TN, TB)
    surv_ref[...] += jnp.sum(terms, axis=0, keepdims=True)             # (1, TB)

    @pl.when(n == pl.num_programs(1) - 1)
    def _finalize():
        surv_ref[...] = surv_ref[...] * (1.0 / num_neg)


def dynemb_forward(inp, emb_table, w_g, b_g, psi, neg1_idx, neg2_idx,
                   *, compute_dtype=jnp.bfloat16, tb=None, tn=None):
    """Plain-JAX glue + Pallas kernel call.

    inp       : (B, 5) int32   event tuples [v1, v2, t, l, k]
    emb_table : (nsize, E) f32 initial embeddings
    w_g       : (K, 2E) f32    stacked weights of g_0 ... g_{K-1}
    b_g       : (K,) f32       stacked biases
    psi       : (K, 1) f32     softplus scale (assumed > 0, as in the module)
    neg1_idx, neg2_idx : (B, N) int32 negative node indices
    Returns (intensity, survival), each shaped (1, B, 1) like the PyTorch code.
    """
    B = inp.shape[0]
    E = emb_table.shape[1]
    K = w_g.shape[0]
    N = neg1_idx.shape[1]

    auto_tb, auto_tn = _choose_tiles(B, N, E)
    tb = auto_tb if tb is None else tb
    tn = auto_tn if tn is None else tn
    assert B % tb == 0 and (tb == B or tb % 128 == 0), (B, tb)
    assert N % tn == 0, (N, tn)
    nchunks = N // tn
    grid = (B // tb, nchunks)

    # ---- input / parameter prep (E on sublanes, batch on lanes) ----
    # TODO(synk): gather the negatives inside the kernel (scalar-prefetched
    #             indices + VMEM/HBM-resident table) instead of materializing
    #             the (N, 2E, B) gathered slab in HBM here.
    emb_c = emb_table.astype(compute_dtype)                     # (nsize, E)
    v1_e = emb_c[inp[:, 0]]                                     # (B, E)
    v2_e = emb_c[inp[:, 1]]
    ev_t = jnp.concatenate([v1_e, v2_e], axis=1).T              # (2E, B)
    n1_e = emb_c[neg1_idx]                                      # (B, N, E)
    n2_e = emb_c[neg2_idx]
    neg_stack = jnp.transpose(
        jnp.concatenate([n1_e, n2_e], axis=2), (1, 2, 0))       # (N, 2E, B)

    wa = w_g[:, :E].astype(compute_dtype)                       # v1 / neg1 half
    wb = w_g[:, E:].astype(compute_dtype)                       # v2 / neg2 half
    zero = jnp.zeros((K, E), compute_dtype)
    w2 = jnp.concatenate(
        [jnp.concatenate([wa, zero], axis=1),
         jnp.concatenate([zero, wb], axis=1)], axis=0)          # (2K, 2E) block-diag

    bias2 = jnp.tile(b_g.reshape(K, 1).astype(jnp.float32), (2, 1))     # (2K, 1)
    psi_col = psi.reshape(K, 1).astype(jnp.float32)
    psi_pack = jnp.tile(psi_col, (2 * tn, 1))                           # (2K*TN, 1)
    inv_psi_pack = 1.0 / psi_pack                                       # hoisted divide
    kidx = inp[:, 4].astype(jnp.int32).reshape(1, B)

    neg_bufs = 2
    neg_spec = pl.BlockSpec((tn, 2 * E, tb), lambda i, n: (n, 0, i))
    if nchunks >= 3:
        try:    # deeper pipelining on the streamed negative slabs
            neg_spec = pl.BlockSpec((tn, 2 * E, tb), lambda i, n: (n, 0, i),
                                    pipeline_mode=pl.Buffered(3))
            neg_bufs = 3
        except Exception:   # older BlockSpec signature — fall back to default
            neg_bufs = 2

    vmem_limit = _vmem_footprint_bytes(E, K, tb, tn, neg_bufs)
    vmem_limit = min(64 * 1024 * 1024,
                     max(16 * 1024 * 1024, int(1.5 * vmem_limit) + (2 << 20)))

    kernel = functools.partial(dynemb_kernel, num_heads=K,
                               neg_per_step=tn, num_neg=N)

    intent, surv = pl.pallas_call(
        kernel,
        out_shape=(jax.ShapeDtypeStruct((1, B), jnp.float32),
                   jax.ShapeDtypeStruct((1, B), jnp.float32)),
        grid_spec=pltpu.PrefetchScalarGridSpec(
            num_scalar_prefetch=0,
            grid=grid,
            in_specs=[
                pl.BlockSpec((2 * E, tb), lambda i, n: (0, i)),       # [v1; v2]
                neg_spec,                                             # negatives
                pl.BlockSpec((2 * K, 2 * E), lambda i, n: (0, 0)),    # W2
                pl.BlockSpec((2 * K, 1), lambda i, n: (0, 0)),        # bias2
                pl.BlockSpec((2 * K * tn, 1), lambda i, n: (0, 0)),   # psi packed
                pl.BlockSpec((2 * K * tn, 1), lambda i, n: (0, 0)),   # 1/psi packed
                pl.BlockSpec((1, tb), lambda i, n: (0, i)),           # head index
            ],
            out_specs=[
                pl.BlockSpec((1, tb), lambda i, n: (0, i)),           # intensity
                pl.BlockSpec((1, tb), lambda i, n: (0, i)),           # survival
            ],
            scratch_shapes=[pltpu.VMEM((2 * K, tb), jnp.float32)],    # [sb+b; sa+b]
        ),
        compiler_params=pltpu.CompilerParams(
            dimension_semantics=("parallel", "arbitrary"),
            vmem_limit_bytes=vmem_limit,
        ),
    )(ev_t, neg_stack, w2, bias2, psi_pack, inv_psi_pack, kidx)

    # Match PyTorch: torch.stack(list_of_(1,1,1), dim=1).squeeze(2) -> (1, B, 1)
    return intent.reshape(1, B, 1), surv.reshape(1, B, 1)


def dynemb_reference(inp, emb_table, w_g, b_g, psi, neg1_idx, neg2_idx,
                     compute_dtype=jnp.bfloat16):
    """Pure-JAX reference of the same math (same bf16 input rounding)."""
    E = emb_table.shape[1]
    K = w_g.shape[0]
    N = neg1_idx.shape[1]
    B = inp.shape[0]

    emb = emb_table.astype(compute_dtype).astype(jnp.float32)
    wa = w_g[:, :E].astype(compute_dtype).astype(jnp.float32)     # (K, E)
    wb = w_g[:, E:].astype(compute_dtype).astype(jnp.float32)
    bias = b_g.reshape(1, K).astype(jnp.float32)
    p = psi.reshape(1, K).astype(jnp.float32)

    def sp(s, pp):
        x = s / pp
        return pp * (jnp.maximum(x, 0.0) + jnp.log(1.0 + jnp.exp(-jnp.abs(x))))

    v1_e = emb[inp[:, 0]]                         # (B, E)
    v2_e = emb[inp[:, 1]]
    n1_e = emb[neg1_idx]                          # (B, N, E)
    n2_e = emb[neg2_idx]
    kone = jax.nn.one_hot(inp[:, 4], K, dtype=jnp.float32)        # (B, K)

    sa_v1 = v1_e @ wa.T                           # (B, K)
    sb_v2 = v2_e @ wb.T
    inten = jnp.sum(sp(sa_v1 + sb_v2 + bias, p) * kone, axis=-1, keepdims=True)

    s1 = sa_v1[:, None, :] + jnp.einsum('bne,ke->bnk', n2_e, wb) + bias
    s2 = jnp.einsum('bne,ke->bnk', n1_e, wa) + sb_v2[:, None, :] + bias
    surv = jnp.sum(sp(s1, p) + sp(s2, p), axis=(1, 2))[:, None] / float(N)

    return inten.reshape(1, B, 1), surv.reshape(1, B, 1)


if __name__ == "__main__":
    # Small deterministic setup consistent with dynemb(nsize, em_size,
    # num_dynamics, eval_batch_size).
    nsize, em_size, num_dynamics, batch = 64, 32, 2, 8
    n_surv = 8   # N negative samples for the survival term

    key = jax.random.PRNGKey(0)
    k_emb, k_w, k_b, k_inp, k_n1, k_n2 = jax.random.split(key, 6)

    # nn.Embedding ~ N(0, 1); nn.Linear(2E, 1) ~ U(-1/sqrt(2E), 1/sqrt(2E)).
    emb_table = jax.random.normal(k_emb, (nsize, em_size), dtype=jnp.float32)
    lim = 1.0 / jnp.sqrt(2.0 * em_size)
    w_g = jax.random.uniform(k_w, (num_dynamics, 2 * em_size),
                             minval=-lim, maxval=lim, dtype=jnp.float32)
    b_g = jax.random.uniform(k_b, (num_dynamics,),
                             minval=-lim, maxval=lim, dtype=jnp.float32)
    psi = jnp.ones((num_dynamics, 1), dtype=jnp.float32)

    # Event tuples: [v1, v2, t, l, k]
    cols = jax.random.randint(k_inp, (batch, 5), 0, nsize, dtype=jnp.int32)
    k_col = jax.random.randint(jax.random.fold_in(k_inp, 1), (batch,), 0,
                               num_dynamics, dtype=jnp.int32)
    inp = cols.at[:, 4].set(k_col)

    # Deterministic negative samples (uniform over node_list = all nodes).
    # TODO(synk): the PyTorch module rejects negatives colliding with {v1, v2}.
    neg1_idx = jax.random.randint(k_n1, (batch, n_surv), 0, nsize, jnp.int32)
    neg2_idx = jax.random.randint(k_n2, (batch, n_surv), 0, nsize, jnp.int32)

    run = jax.jit(dynemb_forward)
    intent, surv = run(inp, emb_table, w_g, b_g, psi, neg1_idx, neg2_idx)
    jax.block_until_ready((intent, surv))

    ref_intent, ref_surv = dynemb_reference(
        inp, emb_table, w_g, b_g, psi, neg1_idx, neg2_idx)
    assert intent.shape == (1, batch, 1) and surv.shape == (1, batch, 1)
    assert jnp.allclose(intent, ref_intent, atol=2e-3, rtol=2e-3), (
        float(jnp.max(jnp.abs(intent - ref_intent))))
    assert jnp.allclose(surv, ref_surv, atol=2e-3, rtol=2e-3), (
        float(jnp.max(jnp.abs(surv - ref_surv))))

    print("KERNEL_OK")
</pallas_src>

<mosaic_0001>
module attributes {stable_mosaic.version = 11 : i64} {
  func.func @dynemb_kernel(%arg0: i32, %arg1: i32, %arg2: memref<64x8xbf16, #tpu.memory_space<vmem>>, %arg3: memref<8x64x8xbf16, #tpu.memory_space<vmem>>, %arg4: memref<4x64xbf16, #tpu.memory_space<vmem>>, %arg5: memref<4x1xf32, #tpu.memory_space<vmem>>, %arg6: memref<32x1xf32, #tpu.memory_space<vmem>>, %arg7: memref<32x1xf32, #tpu.memory_space<vmem>>, %arg8: memref<1x8xi32, #tpu.memory_space<vmem>>, %arg9: memref<1x8xf32, #tpu.memory_space<vmem>>, %arg10: memref<1x8xf32, #tpu.memory_space<vmem>>, %arg11: memref<4x8xf32, #tpu.memory_space<vmem>>) attributes {dimension_semantics = [#tpu.dimension_semantics<parallel>, #tpu.dimension_semantics<arbitrary>], iteration_bounds = array<i64: 1, 1>, scalar_prefetch = 0 : i64, scratch_operands = 1 : i64, tpu.core_type = #tpu.core_type<tc>, window_params = [{transform_indices = @transform_0, window_bounds = array<i64: 64, 8>}, {transform_indices = @transform_1, window_bounds = array<i64: 8, 64, 8>}, {pipeline_mode = #tpu.pipeline_mode<synchronous>, transform_indices = @transform_2, window_bounds = array<i64: 4, 64>}, {pipeline_mode = #tpu.pipeline_mode<synchronous>, transform_indices = @transform_3, window_bounds = array<i64: 4, 1>}, {pipeline_mode = #tpu.pipeline_mode<synchronous>, transform_indices = @transform_4, window_bounds = array<i64: 32, 1>}, {pipeline_mode = #tpu.pipeline_mode<synchronous>, transform_indices = @transform_5, window_bounds = array<i64: 32, 1>}, {transform_indices = @transform_6, window_bounds = array<i64: 1, 8>}, {transform_indices = @transform_7, window_bounds = array<i64: 1, 8>}, {transform_indices = @transform_8, window_bounds = array<i64: 1, 8>}]} {
    %c0 = arith.constant 0 : index
    %c0_0 = arith.constant 0 : index
    %0 = vector.load %arg4[%c0, %c0_0] : memref<4x64xbf16, #tpu.memory_space<vmem>>, vector<4x64xbf16>
    %c0_1 = arith.constant 0 : index
    %c0_2 = arith.constant 0 : index
    %1 = vector.load %arg6[%c0_1, %c0_2] : memref<32x1xf32, #tpu.memory_space<vmem>>, vector<32x1xf32>
    %c0_3 = arith.constant 0 : index
    %c0_4 = arith.constant 0 : index
    %2 = vector.load %arg7[%c0_3, %c0_4] : memref<32x1xf32, #tpu.memory_space<vmem>>, vector<32x1xf32>
    %c0_i32 = arith.constant 0 : i32
    %3 = arith.cmpi eq, %arg1, %c0_i32 : i32
    %4 = arith.extui %3 : i1 to i32
    %c0_i32_5 = arith.constant 0 : i32
    %5 = arith.cmpi ne, %4, %c0_i32_5 : i32
    scf.if %5 {
      %c0_42 = arith.constant 0 : index
      %c0_43 = arith.constant 0 : index
      %62 = vector.load %arg5[%c0_42, %c0_43] : memref<4x1xf32, #tpu.memory_space<vmem>>, vector<4x1xf32>
      %c0_44 = arith.constant 0 : index
      %c0_45 = arith.constant 0 : index
      %63 = vector.load %arg2[%c0_44, %c0_45] : memref<64x8xbf16, #tpu.memory_space<vmem>>, vector<64x8xbf16>
      %cst_46 = arith.constant dense<0.000000e+00> : vector<4x8xf32>
      %64 = tpu.matmul %0, %63, %cst_46 {dimension_numbers = #tpu.dot_dimension_numbers<[1], [0], [0], [1], [0, 0, 1, 1], [], []>} : vector<4x64xbf16>, vector<64x8xbf16>, vector<4x8xf32> -> vector<4x8xf32>
      %65 = vector.extract_strided_slice %64 {offsets = [0, 0], sizes = [2, 8], strides = [1, 1]} : vector<4x8xf32> to vector<2x8xf32>
      %66 = vector.extract_strided_slice %64 {offsets = [2, 0], sizes = [2, 8], strides = [1, 1]} : vector<4x8xf32> to vector<2x8xf32>
      %67 = arith.addf %65, %66 : vector<2x8xf32>
      %68 = vector.extract_strided_slice %62 {offsets = [0, 0], sizes = [2, 1], strides = [1, 1]} : vector<4x1xf32> to vector<2x1xf32>
      %69 = vector.broadcast %68 : vector<2x1xf32> to vector<2x8xf32>
      %70 = arith.addf %67, %69 : vector<2x8xf32>
      %71 = vector.extract_strided_slice %1 {offsets = [0, 0], sizes = [2, 1], strides = [1, 1]} : vector<32x1xf32> to vector<2x1xf32>
      %72 = vector.extract_strided_slice %2 {offsets = [0, 0], sizes = [2, 1], strides = [1, 1]} : vector<32x1xf32> to vector<2x1xf32>
      %73 = vector.broadcast %72 : vector<2x1xf32> to vector<2x8xf32>
      %74 = arith.mulf %70, %73 : vector<2x8xf32>
      %cst_47 = arith.constant 0.000000e+00 : f32
      %75 = vector.broadcast %cst_47 : f32 to vector<2x8xf32>
      %76 = arith.maximumf %74, %75 : vector<2x8xf32>
      %77 = math.absf %74 : vector<2x8xf32>
      %cst_48 = arith.constant 0.000000e+00 : f32
      %78 = vector.broadcast %cst_48 : f32 to vector<2x8xf32>
      %79 = arith.subf %78, %77 : vector<2x8xf32>
      %80 = math.exp %79 : vector<2x8xf32>
      %cst_49 = arith.constant 1.000000e+00 : f32
      %81 = vector.broadcast %cst_49 : f32 to vector<2x8xf32>
      %82 = arith.addf %81, %80 : vector<2x8xf32>
      %83 = math.log %82 : vector<2x8xf32>
      %84 = arith.addf %76, %83 : vector<2x8xf32>
      %85 = vector.broadcast %71 : vector<2x1xf32> to vector<2x8xf32>
      %86 = arith.mulf %85, %84 : vector<2x8xf32>
      %87 = tpu.iota {dimensions = array<i32: 0>} : vector<2x8xi32>
      %c0_50 = arith.constant 0 : index
      %c0_51 = arith.constant 0 : index
      %88 = vector.load %arg8[%c0_50, %c0_51] : memref<1x8xi32, #tpu.memory_space<vmem>>, vector<1x8xi32>
      %89 = vector.broadcast %88 : vector<1x8xi32> to vector<2x8xi32>
      %90 = arith.cmpi eq, %87, %89 : vector<2x8xi32>
      %cst_52 = arith.constant 0.000000e+00 : f32
      %91 = vector.broadcast %cst_52 : f32 to vector<2x8xf32>
      %92 = arith.select %90, %86, %91 : vector<2x8xi1>, vector<2x8xf32>
      %cst_53 = arith.constant dense<0.000000e+00> : vector<8xf32>
      %93 = vector.multi_reduction <add>, %92, %cst_53 [0] : vector<2x8xf32> to vector<8xf32>
      %94 = vector.shape_cast %93 : vector<8xf32> to vector<1x8xf32>
      %c0_54 = arith.constant 0 : index
      %c0_55 = arith.constant 0 : index
      %95 = vector.load %arg9[%c0_54, %c0_55] : memref<1x8xf32, #tpu.memory_space<vmem>>, vector<1x8xf32>
      tpu.vector_store %arg9[%c0_54, %c0_55], %94 {strides = array<i32>} : memref<1x8xf32, #tpu.memory_space<vmem>>, vector<1x8xf32>,
      %96 = tpu.concatenate %66, %65 in 0 : vector<2x8xf32>, vector<2x8xf32> -> vector<4x8xf32>
      %97 = vector.broadcast %62 : vector<4x1xf32> to vector<4x8xf32>
      %98 = arith.addf %96, %97 : vector<4x8xf32>
      %c0_56 = arith.constant 0 : index
      %c0_57 = arith.constant 0 : index
      %99 = vector.load %arg11[%c0_56, %c0_57] : memref<4x8xf32, #tpu.memory_space<vmem>>, vector<4x8xf32>
      tpu.vector_store %arg11[%c0_56, %c0_57], %98 {strides = array<i32>} : memref<4x8xf32, #tpu.memory_space<vmem>>, vector<4x8xf32>,
      %cst_58 = arith.constant 0.000000e+00 : f32
      %100 = vector.broadcast %cst_58 : f32 to vector<1x8xf32>
      %c0_59 = arith.constant 0 : index
      %c0_60 = arith.constant 0 : index
      %101 = vector.load %arg10[%c0_59, %c0_60] : memref<1x8xf32, #tpu.memory_space<vmem>>, vector<1x8xf32>
      tpu.vector_store %arg10[%c0_59, %c0_60], %100 {strides = array<i32>} : memref<1x8xf32, #tpu.memory_space<vmem>>, vector<1x8xf32>,
    } else {
    }
    %c0_6 = arith.constant 0 : index
    %c0_7 = arith.constant 0 : index
    %6 = vector.load %arg11[%c0_6, %c0_7] : memref<4x8xf32, #tpu.memory_space<vmem>>, vector<4x8xf32>
    %c0_8 = arith.constant 0 : index
    %c0_9 = arith.constant 0 : index
    %c0_10 = arith.constant 0 : index
    %7 = vector.load %arg3[%c0_8, %c0_9, %c0_10] : memref<8x64x8xbf16, #tpu.memory_space<vmem>>, vector<1x64x8xbf16>
    %8 = vector.shape_cast %7 : vector<1x64x8xbf16> to vector<64x8xbf16>
    %cst = arith.constant dense<0.000000e+00> : vector<4x8xf32>
    %9 = tpu.matmul %0, %8, %cst {dimension_numbers = #tpu.dot_dimension_numbers<[1], [0], [0], [1], [0, 0, 1, 1], [], []>} : vector<4x64xbf16>, vector<64x8xbf16>, vector<4x8xf32> -> vector<4x8xf32>
    %10 = arith.addf %9, %6 : vector<4x8xf32>
    %c1 = arith.constant 1 : index
    %c0_11 = arith.constant 0 : index
    %c0_12 = arith.constant 0 : index
    %11 = vector.load %arg3[%c1, %c0_11, %c0_12] : memref<8x64x8xbf16, #tpu.memory_space<vmem>>, vector<1x64x8xbf16>
    %12 = vector.shape_cast %11 : vector<1x64x8xbf16> to vector<64x8xbf16>
    %cst_13 = arith.constant dense<0.000000e+00> : vector<4x8xf32>
    %13 = tpu.matmul %0, %12, %cst_13 {dimension_numbers = #tpu.dot_dimension_numbers<[1], [0], [0], [1], [0, 0, 1, 1], [], []>} : vector<4x64xbf16>, vector<64x8xbf16>, vector<4x8xf32> -> vector<4x8xf32>
    %14 = arith.addf %13, %6 : vector<4x8xf32>
    %c2 = arith.constant 2 : index
    %c0_14 = arith.constant 0 : index
    %c0_15 = arith.constant 0 : index
    %15 = vector.load %arg3[%c2, %c0_14, %c0_15] : memref<8x64x8xbf16, #tpu.memory_space<vmem>>, vector<1x64x8xbf16>
    %16 = vector.shape_cast %15 : vector<1x64x8xbf16> to vector<64x8xbf16>
    %cst_16 = arith.constant dense<0.000000e+00> : vector<4x8xf32>
    %17 = tpu.matmul %0, %16, %cst_16 {dimension_numbers = #tpu.dot_dimension_numbers<[1], [0], [0], [1], [0, 0, 1, 1], [], []>} : vector<4x64xbf16>, vector<64x8xbf16>, vector<4x8xf32> -> vector<4x8xf32>
    %18 = arith.addf %17, %6 : vector<4x8xf32>
    %c3 = arith.constant 3 : index
    %c0_17 = arith.constant 0 : index
    %c0_18 = arith.constant 0 : index
    %19 = vector.load %arg3[%c3, %c0_17, %c0_18] : memref<8x64x8xbf16, #tpu.memory_space<vmem>>, vector<1x64x8xbf16>
    %20 = vector.shape_cast %19 : vector<1x64x8xbf16> to vector<64x8xbf16>
    %cst_19 = arith.constant dense<0.000000e+00> : vector<4x8xf32>
    %21 = tpu.matmul %0, %20, %cst_19 {dimension_numbers = #tpu.dot_dimension_numbers<[1], [0], [0], [1], [0, 0, 1, 1], [], []>} : vector<4x64xbf16>, vector<64x8xbf16>, vector<4x8xf32> -> vector<4x8xf32>
    %22 = arith.addf %21, %6 : vector<4x8xf32>
    %c4 = arith.constant 4 : index
    %c0_20 = arith.constant 0 : index
    %c0_21 = arith.constant 0 : index
    %23 = vector.load %arg3[%c4, %c0_20, %c0_21] : memref<8x64x8xbf16, #tpu.memory_space<vmem>>, vector<1x64x8xbf16>
    %24 = vector.shape_cast %23 : vector<1x64x8xbf16> to vector<64x8xbf16>
    %cst_22 = arith.constant dense<0.000000e+00> : vector<4x8xf32>
    %25 = tpu.matmul %0, %24, %cst_22 {dimension_numbers = #tpu.dot_dimension_numbers<[1], [0], [0], [1], [0, 0, 1, 1], [], []>} : vector<4x64xbf16>, vector<64x8xbf16>, vector<4x8xf32> -> vector<4x8xf32>
    %26 = arith.addf %25, %6 : vector<4x8xf32>
    %c5 = arith.constant 5 : index
    %c0_23 = arith.constant 0 : index
    %c0_24 = arith.constant 0 : index
    %27 = vector.load %arg3[%c5, %c0_23, %c0_24] : memref<8x64x8xbf16, #tpu.memory_space<vmem>>, vector<1x64x8xbf16>
    %28 = vector.shape_cast %27 : vector<1x64x8xbf16> to vector<64x8xbf16>
    %cst_25 = arith.constant dense<0.000000e+00> : vector<4x8xf32>
    %29 = tpu.matmul %0, %28, %cst_25 {dimension_numbers = #tpu.dot_dimension_numbers<[1], [0], [0], [1], [0, 0, 1, 1], [], []>} : vector<4x64xbf16>, vector<64x8xbf16>, vector<4x8xf32> -> vector<4x8xf32>
    %30 = arith.addf %29, %6 : vector<4x8xf32>
    %c6 = arith.constant 6 : index
    %c0_26 = arith.constant 0 : index
    %c0_27 = arith.constant 0 : index
    %31 = vector.load %arg3[%c6, %c0_26, %c0_27] : memref<8x64x8xbf16, #tpu.memory_space<vmem>>, vector<1x64x8xbf16>
    %32 = vector.shape_cast %31 : vector<1x64x8xbf16> to vector<64x8xbf16>
    %cst_28 = arith.constant dense<0.000000e+00> : vector<4x8xf32>
    %33 = tpu.matmul %0, %32, %cst_28 {dimension_numbers = #tpu.dot_dimension_numbers<[1], [0], [0], [1], [0, 0, 1, 1], [], []>} : vector<4x64xbf16>, vector<64x8xbf16>, vector<4x8xf32> -> vector<4x8xf32>
    %34 = arith.addf %33, %6 : vector<4x8xf32>
    %c7 = arith.constant 7 : index
    %c0_29 = arith.constant 0 : index
    %c0_30 = arith.constant 0 : index
    %35 = vector.load %arg3[%c7, %c0_29, %c0_30] : memref<8x64x8xbf16, #tpu.memory_space<vmem>>, vector<1x64x8xbf16>
    %36 = vector.shape_cast %35 : vector<1x64x8xbf16> to vector<64x8xbf16>
    %cst_31 = arith.constant dense<0.000000e+00> : vector<4x8xf32>
    %37 = tpu.matmul %0, %36, %cst_31 {dimension_numbers = #tpu.dot_dimension_numbers<[1], [0], [0], [1], [0, 0, 1, 1], [], []>} : vector<4x64xbf16>, vector<64x8xbf16>, vector<4x8xf32> -> vector<4x8xf32>
    %38 = arith.addf %37, %6 : vector<4x8xf32>
    %39 = tpu.concatenate %10, %14, %18, %22, %26, %30, %34, %38 in 0 : vector<4x8xf32>, vector<4x8xf32>, vector<4x8xf32>, vector<4x8xf32>, vector<4x8xf32>, vector<4x8xf32>, vector<4x8xf32>, vector<4x8xf32> -> vector<32x8xf32>
    %40 = vector.broadcast %2 : vector<32x1xf32> to vector<32x8xf32>
    %41 = arith.mulf %39, %40 : vector<32x8xf32>
    %cst_32 = arith.constant 0.000000e+00 : f32
    %42 = vector.broadcast %cst_32 : f32 to vector<32x8xf32>
    %43 = arith.maximumf %41, %42 : vector<32x8xf32>
    %44 = math.absf %41 : vector<32x8xf32>
    %cst_33 = arith.constant 0.000000e+00 : f32
    %45 = vector.broadcast %cst_33 : f32 to vector<32x8xf32>
    %46 = arith.subf %45, %44 : vector<32x8xf32>
    %47 = math.exp %46 : vector<32x8xf32>
    %cst_34 = arith.constant 1.000000e+00 : f32
    %48 = vector.broadcast %cst_34 : f32 to vector<32x8xf32>
    %49 = arith.addf %48, %47 : vector<32x8xf32>
    %50 = math.log %49 : vector<32x8xf32>
    %51 = arith.addf %43, %50 : vector<32x8xf32>
    %52 = vector.broadcast %1 : vector<32x1xf32> to vector<32x8xf32>
    %53 = arith.mulf %52, %51 : vector<32x8xf32>
    %c0_35 = arith.constant 0 : index
    %c0_36 = arith.constant 0 : index
    %54 = vector.load %arg10[%c0_35, %c0_36] : memref<1x8xf32, #tpu.memory_space<vmem>>, vector<1x8xf32>
    %cst_37 = arith.constant dense<0.000000e+00> : vector<8xf32>
    %55 = vector.multi_reduction <add>, %53, %cst_37 [0] : vector<32x8xf32> to vector<8xf32>
    %56 = vector.shape_cast %55 : vector<8xf32> to vector<1x8xf32>
    %57 = arith.addf %54, %56 : vector<1x8xf32>
    %c0_38 = arith.constant 0 : index
    %c0_39 = arith.constant 0 : index
    %58 = vector.load %arg10[%c0_38, %c0_39] : memref<1x8xf32, #tpu.memory_space<vmem>>, vector<1x8xf32>
    tpu.vector_store %arg10[%c0_38, %c0_39], %57 {strides = array<i32>} : memref<1x8xf32, #tpu.memory_space<vmem>>, vector<1x8xf32>,
    %c0_i32_40 = arith.constant 0 : i32
    %59 = arith.cmpi eq, %arg1, %c0_i32_40 : i32
    %60 = arith.extui %59 : i1 to i32
    %c0_i32_41 = arith.constant 0 : i32
    %61 = arith.cmpi ne, %60, %c0_i32_41 : i32
    scf.if %61 {
      %c0_42 = arith.constant 0 : index
      %c0_43 = arith.constant 0 : index
      %62 = vector.load %arg10[%c0_42, %c0_43] : memref<1x8xf32, #tpu.memory_space<vmem>>, vector<1x8xf32>
      %cst_44 = arith.constant 1.250000e-01 : f32
      %63 = vector.broadcast %cst_44 : f32 to vector<1x8xf32>
      %64 = arith.mulf %62, %63 : vector<1x8xf32>
      %c0_45 = arith.constant 0 : index
      %c0_46 = arith.constant 0 : index
      %65 = vector.load %arg10[%c0_45, %c0_46] : memref<1x8xf32, #tpu.memory_space<vmem>>, vector<1x8xf32>
      tpu.vector_store %arg10[%c0_45, %c0_46], %64 {strides = array<i32>} : memref<1x8xf32, #tpu.memory_space<vmem>>, vector<1x8xf32>,
    } else {
    }
    return
  }
  func.func @transform_0(%arg0: i32, %arg1: i32) -> (i32, i32) {
    %c0_i32 = arith.constant 0 : i32
    %c0_i32_0 = arith.constant 0 : i32
    return %c0_i32, %arg0 : i32, i32
  }
  func.func @transform_1(%arg0: i32, %arg1: i32) -> (i32, i32, i32) {
    %c0_i32 = arith.constant 0 : i32
    %c0_i32_0 = arith.constant 0 : i32
    return %arg1, %c0_i32, %arg0 : i32, i32, i32
  }
  func.func @transform_2(%arg0: i32, %arg1: i32) -> (i32, i32) {
    %c0_i32 = arith.constant 0 : i32
    %c0_i32_0 = arith.constant 0 : i32
    %c0_i32_1 = arith.constant 0 : i32
    return %c0_i32, %c0_i32_0 : i32, i32
  }
  func.func @transform_3(%arg0: i32, %arg1: i32) -> (i32, i32) {
    %c0_i32 = arith.constant 0 : i32
    %c0_i32_0 = arith.constant 0 : i32
    %c0_i32_1 = arith.constant 0 : i32
    return %c0_i32, %c0_i32_0 : i32, i32
  }
  func.func @transform_4(%arg0: i32, %arg1: i32) -> (i32, i32) {
    %c0_i32 = arith.constant 0 : i32
    %c0_i32_0 = arith.constant 0 : i32
    %c0_i32_1 = arith.constant 0 : i32
    return %c0_i32, %c0_i32_0 : i32, i32
  }
  func.func @transform_5(%arg0: i32, %arg1: i32) -> (i32, i32) {
    %c0_i32 = arith.constant 0 : i32
    %c0_i32_0 = arith.constant 0 : i32
    %c0_i32_1 = arith.constant 0 : i32
    return %c0_i32, %c0_i32_0 : i32, i32
  }
  func.func @transform_6(%arg0: i32, %arg1: i32) -> (i32, i32) {
    %c0_i32 = arith.constant 0 : i32
    %c0_i32_0 = arith.constant 0 : i32
    return %c0_i32, %arg0 : i32, i32
  }
  func.func @transform_7(%arg0: i32, %arg1: i32) -> (i32, i32) {
    %c0_i32 = arith.constant 0 : i32
    %c0_i32_0 = arith.constant 0 : i32
    return %c0_i32, %arg0 : i32, i32
  }
  func.func @transform_8(%arg0: i32, %arg1: i32) -> (i32, i32) {
    %c0_i32 = arith.constant 0 : i32
    %c0_i32_0 = arith.constant 0 : i32
    return %c0_i32, %arg0 : i32, i32
  }
}

</mosaic_0001>

<llo_original>
// kernel: dynemb_forward.1
$region0: #{dynemb_forward.1}
  #allocation0 [shape = 'u32[]', space=smem, size = 0x4, offset = 0x4, fixed_abs, tag = 'smem constant byte address 0x4 - core index']
  #allocation1 [shape = 'u32[144,128]{1,0:T(1,128)}', space=vmem, size = 0x12000, scoped, tag = 'internal scratch']
  #allocation2 [shape = 'f32[4,8]{1,0:T(4,128)}', space=vmem, size = 0x800, scoped, tag = 'scratch operand']
  %s0 = inlined_call_operand.vmem [shape: bf16[64,8], index: 0, kind: input, shape index: {}]
  %s1 = inlined_call_operand.vmem [shape: bf16[8,64,8], index: 1, kind: input, shape index: {}]
  %s2 = inlined_call_operand.vmem [shape: bf16[4,64], index: 2, kind: input, shape index: {}]
  %s3 = inlined_call_operand.vmem [shape: f32[4,1], index: 3, kind: input, shape index: {}]
  %s4 = inlined_call_operand.vmem [shape: f32[32,1], index: 4, kind: input, shape index: {}]
  %s5 = inlined_call_operand.vmem [shape: f32[32,1], index: 5, kind: input, shape index: {}]
  %s6 = inlined_call_operand.vmem [shape: s32[1,8], index: 6, kind: input, shape index: {}]
  %s7 = inlined_call_operand.hbm [shape: f32[1,8], index: 7, kind: output, shape index: {0}]
  %s8 = inlined_call_operand.hbm [shape: f32[1,8], index: 8, kind: output, shape index: {1}]
  %9 = xla_tuple %s7, %s8
  %s10 = sld [smem:[#allocation0]]
  $region54: #{dynemb_forward.1} parent=0
    _
  %s12 = ssub.s32 1, %s10
  %s13 = scalar_select 0, %s12, %s10
  $region1: #{dynemb_forward.1} parent=0
    #allocation3 [shape = 'u8[512]{0}', space=vmem, size = 0x400, scoped, tag = 'output window, operand 0, single buffered']
    #allocation4 [shape = 's32[1]{0}', space=sflag, size = 0x4, scoped, tag = 'scoped memory for dynemb_forward.1']
    #allocation5 [shape = 'u8[512]{0}', space=vmem, size = 0x400, scoped, tag = 'output window, operand 1, single buffered']
    #allocation6 [shape = 's32[1]{0}', space=sflag, size = 0x4, scoped, tag = 'scoped memory for dynemb_forward.1']
    %14 = vsyncpa [#allocation4], 0
    %15 = vsyncpa [#allocation6], 0
    // Predicated region
    $region2: #{dynemb_forward.1} parent=1 // pred_check
      _
    $region3: #{dynemb_forward.1} parent=1 // pred_check_branch
      %17 = sbr.rel (0) target = $region5
    $region4: #{dynemb_forward.1} parent=1 // pred_region
      _
    $region5: #{dynemb_forward.1} parent=1 // pred_fallthru
      _
    // Predicated region
    $region6: #{dynemb_forward.1} parent=1 // pred_check
      _
    $region7: #{dynemb_forward.1} parent=1 // pred_check_branch
      %19 = sbr.rel (0) target = $region9
    $region8: #{dynemb_forward.1} parent=1 // pred_region
      _
    $region9: #{dynemb_forward.1} parent=1 // pred_fallthru
      _
    // Predicated region
    $region10: #{dynemb_forward.1} parent=1 // pred_check
      _
    $region11: #{dynemb_forward.1} parent=1 // pred_check_branch
      %21 = sbr.rel (0) target = $region13
    $region12: #{dynemb_forward.1} parent=1 // pred_region
      _
    $region13: #{dynemb_forward.1} parent=1 // pred_fallthru
      _
    // Predicated region
    $region14: #{dynemb_forward.1} parent=1 // pred_check
      _
    $region15: #{dynemb_forward.1} parent=1 // pred_check_branch
      %23 = sbr.rel (0) target = $region17
    $region16: #{dynemb_forward.1} parent=1 // pred_region
      _
    $region17: #{dynemb_forward.1} parent=1 // pred_fallthru
      _
    // Predicated region
    $region18: #{dynemb_forward.1} parent=1 // pred_check
      _
    $region19: #{dynemb_forward.1} parent=1 // pred_check_branch
      %25 = sbr.rel (0) target = $region21
    $region20: #{dynemb_forward.1} parent=1 // pred_region
      _
    $region21: #{dynemb_forward.1} parent=1 // pred_fallthru
      _
    // Predicated region
    $region22: #{dynemb_forward.1} parent=1 // pred_check
      _
    $region23: #{dynemb_forward.1} parent=1 // pred_check_branch
      %27 = sbr.rel (0) target = $region25
    $region24: #{dynemb_forward.1} parent=1 // pred_region
      _
    $region25: #{dynemb_forward.1} parent=1 // pred_fallthru
      _
    // Predicated region
    $region26: #{dynemb_forward.1} parent=1 // pred_check
      _
    $region27: #{dynemb_forward.1} parent=1 // pred_check_branch
      %29 = sbr.rel (0) target = $region29
    $region28: #{dynemb_forward.1} parent=1 // pred_region
      _
    $region29: #{dynemb_forward.1} parent=1 // pred_fallthru
      _
    %v31 = vld [vmem:[%s2] sm:$0x3]
    %v32 = vld [vmem:[%s4] sm:$0xff]
    %v33 = vld [vmem:[%s4 + $0x8] sm:$0xff]
    %v34 = vld [vmem:[%s4 + $0x10] sm:$0xff]
    %v35 = vld [vmem:[%s4 + $0x18] sm:$0xff]
    %v36 = vld [vmem:[%s5] sm:$0xff]
    %v37 = vld [vmem:[%s5 + $0x8] sm:$0xff]
    %v38 = vld [vmem:[%s5 + $0x10] sm:$0xff]
    %v39 = vld [vmem:[%s5 + $0x18] sm:$0xff]
    %p40 = scmp.eq.s32.totalorder 0, 0
    // Predicated region
    $region30: #{dynemb_forward.1} parent=1 // pred_check
      %p41 = pneg %p40
    $region31: #{dynemb_forward.1} parent=1 // pred_check_branch
      %43 = sbr.rel (%p41) target = $region33
    $region32: #{dynemb_forward.1} parent=1 // pred_region
      %v44 = vld [vmem:[%s3] sm:$0xf]
      %v45 = vld [vmem:[%s0] sm:$0xf]
      %v46 = vld [vmem:[%s0 + $0x4] sm:$0xf]
      %v47 = vld [vmem:[%s0 + $0x8] sm:$0xf]
      %v48 = vld [vmem:[%s0 + $0xc] sm:$0xf]
      %v49 = vld [vmem:[%s0 + $0x10] sm:$0xf]
      %v50 = vld [vmem:[%s0 + $0x14] sm:$0xf]
      %v51 = vld [vmem:[%s0 + $0x18] sm:$0xf]
      %v52 = vld [vmem:[%s0 + $0x1c] sm:$0xf]
      %v61 = vunpack.c.l.b16 %v45
      %v62 = vunpack.c.l.b16 %v46
      %v63 = vunpack.c.l.b16 %v47
      %v64 = vunpack.c.l.b16 %v48
      %v65 = vunpack.c.l.b16 %v49
      %v66 = vunpack.c.l.b16 %v50
      %v67 = vunpack.c.l.b16 %v51
      %v68 = vunpack.c.l.b16 %v52
      %v69 = vpack.c.b16 %v62, %v61
      %v70 = vpack.c.b16 %v64, %v63
      %v71 = vpack.c.b16 %v66, %v65
      %v72 = vpack.c.b16 %v68, %v67
      %vm77 = vcmask 523264
      %v79 = vsel %vm77, %v31, 0
      %81 = vmatprep.subr.bf16.mxu0 0
      %82 = vmatpush1.bf16.msra.mxu0 %v69
      %83 = vmatprep.subr.bf16.mxu0 0
      %84 = vmatpush1.bf16.msra.mxu0 %v70
      %85 = vmatprep.subr.bf16.mxu0 0
      %86 = vmatpush1.bf16.msra.mxu0 %v71
      %87 = vmatprep.subr.bf16.mxu0 0
      %88 = vmatpush1.bf16.msra.mxu0 %v72
      %89 = vmatprep.subr.bf16.mxu0 0
      %90 = vmatpush1.bf16.msra.mxu0 0
      %91 = vmatprep.subr.bf16.mxu0 0
      %92 = vmatpush1.bf16.msra.mxu0 0
      %93 = vmatprep.subr.bf16.mxu0 0
      %94 = vmatpush1.bf16.msra.mxu0 0
      %95 = vmatprep.subr.bf16.mxu0 0
      %96 = vmatpush1.bf16.msra.mxu0 0
      %97 = vmatprep.subr.bf16.mxu0 0
      %98 = vmatpush1.bf16.msra.mxu0 0
      %99 = vmatprep.subr.bf16.mxu0 0
      %100 = vmatpush1.bf16.msra.mxu0 0
      %101 = vmatprep.subr.bf16.mxu0 0
      %102 = vmatpush1.bf16.msra.mxu0 0
      %103 = vmatprep.subr.bf16.mxu0 0
      %104 = vmatpush1.bf16.msra.mxu0 0
      %105 = vmatprep.subr.bf16.mxu0 0
      %106 = vmatpush1.bf16.msra.mxu0 0
      %107 = vmatprep.subr.bf16.mxu0 0
      %108 = vmatpush1.bf16.msra.mxu0 0
      %109 = vmatprep.subr.bf16.mxu0 0
      %110 = vmatpush1.bf16.msra.mxu0 0
      %111 = vmatprep.subr.bf16.mxu0 0
      %112 = vmatpush1.bf16.msra.mxu0 0
      %113 = vmatprep.mubr.bf16.mxu0 0
      %114 = vmatmul.mubr.bf16.gmra.mrb[0].mxu0 %v79
      %v115 = vpop.f32.mrb[0].mxu0
      %v116 = vadd.f32 0.0, %v115
      %v117 = vpop.f32.mrb[0].mxu0
      %v118 = vpop.f32.mrb[0].mxu0
      %v119 = vpop.f32.mrb[0].mxu0
      %120 = vdwg.mxu0
      %v122 = vrot.slane %v116, 2
      %v124 = vadd.f32 %v116, %v122
      %126 = vset.pattern.permute.xlu0 0
      %127 = vperm.xlu0 %126, %v44
      %v128 = vpop.permute.xlu0 %127
      %v130 = vadd.f32 %v124, %v128
      %132 = vset.pattern.permute.xlu0 0
      %133 = vperm.xlu0 %132, %v36
      %v134 = vpop.permute.xlu0 %133
      %v136 = vmul.f32 %v130, %v134
      %v137 = vmax.f32 %v136, 0.0
      %v138 = vand.u32 2147483647, %v136
      %v139 = vsub.f32 0.0, %v138
      %v140 = vmul.f32 %v139, 1.442695
      %v141 = vpow.pop %v140
      %v142 = vadd.f32 %v141, 1.0
      %v143 = vlog2.pop %v142
      %v144 = vmul.f32 %v143, 0.6931472
      %v145 = vadd.f32 %v137, %v144
      %147 = vset.pattern.permute.xlu0 0
      %148 = vperm.xlu0 %147, %v32
      %v149 = vpop.permute.xlu0 %148
      %v151 = vmul.f32 %v149, %v145
      %v152 = vlaneseq
      %v153 = vshrl.u32 %v152, 7
      %v154 = vld [vmem:[%s6] sm:$0x1]
      %v155 = vlaneseq
      %v156 = vshrl.u32 %v155, 7
      %v157 = vsub.s32 0, %v156
      %v158 = vrot.slane %v154, %v157
      %vm159 = vcmp.eq.s32.totalorder %v153, %v158
      %v160 = vsel %vm159, %v151, 0.0
      %vm161 = vcmask 58368
      %v162 = vsel %vm161, %v160, 0.0
      %v163 = vrot.slane %v162, 4
      %v164 = vadd.f32 %v162, %v163
      %v165 = vrot.slane %v164, 2
      %v166 = vadd.f32 %v164, %v165
      %v167 = vrot.slane %v166, 1
      %v168 = vadd.f32 %v166, %v167
      %vm169 = vcmask 57344
      %170 = vst.msk [vmem:[#allocation3] sm:$0x1] %vm169, %v168
      %v171 = vrot.slane %v116, 6
      %vm173 = vcmask 1041408
      %v174 = vsel %vm173, %v122, %v171
      %v175 = vadd.f32 %v174, %v128
      %vm176 = vcmask 60416
      %177 = vst.msk [vmem:[#allocation2] sm:$0xf] %vm176, %v175
      %178 = vst.msk [vmem:[#allocation5] sm:$0x1] %vm169, 0.0
    $region33: #{dynemb_forward.1} parent=1 // pred_fallthru
      _
    %v179 = vld [vmem:[#allocation2] sm:$0xf]
    %v180 = vld [vmem:[%s1] sm:$0xf]
    %v181 = vld [vmem:[%s1 + $0x4] sm:$0xf]
    %v182 = vld [vmem:[%s1 + $0x8] sm:$0xf]
    %v183 = vld [vmem:[%s1 + $0xc] sm:$0xf]
    %v184 = vld [vmem:[%s1 + $0x10] sm:$0xf]
    %v185 = vld [vmem:[%s1 + $0x14] sm:$0xf]
    %v186 = vld [vmem:[%s1 + $0x18] sm:$0xf]
    %v187 = vld [vmem:[%s1 + $0x1c] sm:$0xf]
    %v196 = vunpack.c.l.b16 %v180
    %v197 = vunpack.c.l.b16 %v181
    %v198 = vunpack.c.l.b16 %v182
    %v199 = vunpack.c.l.b16 %v183
    %v200 = vunpack.c.l.b16 %v184
    %v201 = vunpack.c.l.b16 %v185
    %v202 = vunpack.c.l.b16 %v186
    %v203 = vunpack.c.l.b16 %v187
    %v204 = vpack.c.b16 %v197, %v196
    %v205 = vpack.c.b16 %v199, %v198
    %v206 = vpack.c.b16 %v201, %v200
    %v207 = vpack.c.b16 %v203, %v202
    %vm212 = vcmask 523264
    %v214 = vsel %vm212, %v31, 0
    %216 = vmatprep.subr.bf16.mxu0 0
    %217 = vmatpush1.bf16.msra.mxu0 %v204
    %218 = vmatprep.subr.bf16.mxu0 0
    %219 = vmatpush1.bf16.msra.mxu0 %v205
    %220 = vmatprep.subr.bf16.mxu0 0
    %221 = vmatpush1.bf16.msra.mxu0 %v206
    %222 = vmatprep.subr.bf16.mxu0 0
    %223 = vmatpush1.bf16.msra.mxu0 %v207
    %224 = vmatprep.subr.bf16.mxu0 0
    %225 = vmatpush1.bf16.msra.mxu0 0
    %226 = vmatprep.subr.bf16.mxu0 0
    %227 = vmatpush1.bf16.msra.mxu0 0
    %228 = vmatprep.subr.bf16.mxu0 0
    %229 = vmatpush1.bf16.msra.mxu0 0
    %230 = vmatprep.subr.bf16.mxu0 0
    %231 = vmatpush1.bf16.msra.mxu0 0
    %232 = vmatprep.subr.bf16.mxu0 0
    %233 = vmatpush1.bf16.msra.mxu0 0
    %234 = vmatprep.subr.bf16.mxu0 0
    %235 = vmatpush1.bf16.msra.mxu0 0
    %236 = vmatprep.subr.bf16.mxu0 0
    %237 = vmatpush1.bf16.msra.mxu0 0
    %238 = vmatprep.subr.bf16.mxu0 0
    %239 = vmatpush1.bf16.msra.mxu0 0
    %240 = vmatprep.subr.bf16.mxu0 0
    %241 = vmatpush1.bf16.msra.mxu0 0
    %242 = vmatprep.subr.bf16.mxu0 0
    %243 = vmatpush1.bf16.msra.mxu0 0
    %244 = vmatprep.subr.bf16.mxu0 0
    %245 = vmatpush1.bf16.msra.mxu0 0
    %246 = vmatprep.subr.bf16.mxu0 0
    %247 = vmatpush1.bf16.msra.mxu0 0
    %248 = vmatprep.mubr.bf16.mxu0 0
    %249 = vmatmul.mubr.bf16.gmra.mrb[0].mxu0 %v214
    %v250 = vpop.f32.mrb[0].mxu0
    %v251 = vadd.f32 %v179, %v250
    %v252 = vpop.f32.mrb[0].mxu0
    %v253 = vpop.f32.mrb[0].mxu0
    %v254 = vpop.f32.mrb[0].mxu0
    %255 = vdwg.mxu0
    %s256 = scalar_lea.vmem %s1, 32
    %v257 = vld [vmem:[%s256] sm:$0xf]
    %v258 = vld [vmem:[%s256 + $0x4] sm:$0xf]
    %v259 = vld [vmem:[%s256 + $0x8] sm:$0xf]
    %v260 = vld [vmem:[%s256 + $0xc] sm:$0xf]
    %v261 = vld [vmem:[%s256 + $0x10] sm:$0xf]
    %v262 = vld [vmem:[%s256 + $0x14] sm:$0xf]
    %v263 = vld [vmem:[%s256 + $0x18] sm:$0xf]
    %v264 = vld [vmem:[%s256 + $0x1c] sm:$0xf]
    %v273 = vunpack.c.l.b16 %v257
    %v274 = vunpack.c.l.b16 %v258
    %v275 = vunpack.c.l.b16 %v259
    %v276 = vunpack.c.l.b16 %v260
    %v277 = vunpack.c.l.b16 %v261
    %v278 = vunpack.c.l.b16 %v262
    %v279 = vunpack.c.l.b16 %v263
    %v280 = vunpack.c.l.b16 %v264
    %v281 = vpack.c.b16 %v274, %v273
    %v282 = vpack.c.b16 %v276, %v275
    %v283 = vpack.c.b16 %v278, %v277
    %v284 = vpack.c.b16 %v280, %v279
    %289 = vmatprep.subr.bf16.mxu0 0
    %290 = vmatpush1.bf16.msra.mxu0 %v281
    %291 = vmatprep.subr.bf16.mxu0 0
    %292 = vmatpush1.bf16.msra.mxu0 %v282
    %293 = vmatprep.subr.bf16.mxu0 0
    %294 = vmatpush1.bf16.msra.mxu0 %v283
    %295 = vmatprep.subr.bf16.mxu0 0
    %296 = vmatpush1.bf16.msra.mxu0 %v284
    %297 = vmatprep.subr.bf16.mxu0 0
    %298 = vmatpush1.bf16.msra.mxu0 0
    %299 = vmatprep.subr.bf16.mxu0 0
    %300 = vmatpush1.bf16.msra.mxu0 0
    %301 = vmatprep.subr.bf16.mxu0 0
    %302 = vmatpush1.bf16.msra.mxu0 0
    %303 = vmatprep.subr.bf16.mxu0 0
    %304 = vmatpush1.bf16.msra.mxu0 0
    %305 = vmatprep.subr.bf16.mxu0 0
    %306 = vmatpush1.bf16.msra.mxu0 0
    %307 = vmatprep.subr.bf16.mxu0 0
    %308 = vmatpush1.bf16.msra.mxu0 0
    %309 = vmatprep.subr.bf16.mxu0 0
    %310 = vmatpush1.bf16.msra.mxu0 0
    %311 = vmatprep.subr.bf16.mxu0 0
    %312 = vmatpush1.bf16.msra.mxu0 0
    %313 = vmatprep.subr.bf16.mxu0 0
    %314 = vmatpush1.bf16.msra.mxu0 0
    %315 = vmatprep.subr.bf16.mxu0 0
    %316 = vmatpush1.bf16.msra.mxu0 0
    %317 = vmatprep.subr.bf16.mxu0 0
    %318 = vmatpush1.bf16.msra.mxu0 0
    %319 = vmatprep.subr.bf16.mxu0 0
    %320 = vmatpush1.bf16.msra.mxu0 0
    %321 = vmatprep.mubr.bf16.mxu0 0
    %322 = vmatmul.mubr.bf16.gmra.mrb[0].mxu0 %v214
    %v323 = vpop.f32.mrb[0].mxu0
    %v324 = vadd.f32 %v179, %v323
    %v325 = vpop.f32.mrb[0].mxu0
    %v326 = vpop.f32.mrb[0].mxu0
    %v327 = vpop.f32.mrb[0].mxu0
    %328 = vdwg.mxu0
    %s329 = scalar_lea.vmem %s1, 64
    %v330 = vld [vmem:[%s329] sm:$0xf]
    %v331 = vld [vmem:[%s329 + $0x4] sm:$0xf]
    %v332 = vld [vmem:[%s329 + $0x8] sm:$0xf]
    %v333 = vld [vmem:[%s329 + $0xc] sm:$0xf]
    %v334 = vld [vmem:[%s329 + $0x10] sm:$0xf]
    %v335 = vld [vmem:[%s329 + $0x14] sm:$0xf]
    %v336 = vld [vmem:[%s329 + $0x18] sm:$0xf]
    %v337 = vld [vmem:[%s329 + $0x1c] sm:$0xf]
    %v346 = vunpack.c.l.b16 %v330
    %v347 = vunpack.c.l.b16 %v331
    %v348 = vunpack.c.l.b16 %v332
    %v349 = vunpack.c.l.b16 %v333
    %v350 = vunpack.c.l.b16 %v334
    %v351 = vunpack.c.l.b16 %v335
    %v352 = vunpack.c.l.b16 %v336
    %v353 = vunpack.c.l.b16 %v337
    %v354 = vpack.c.b16 %v347, %v346
    %v355 = vpack.c.b16 %v349, %v348
    %v356 = vpack.c.b16 %v351, %v350
    %v357 = vpack.c.b16 %v353, %v352
    %362 = vmatprep.subr.bf16.mxu0 0
    %363 = vmatpush1.bf16.msra.mxu0 %v354
    %364 = vmatprep.subr.bf16.mxu0 0
    %365 = vmatpush1.bf16.msra.mxu0 %v355
    %366 = vmatprep.subr.bf16.mxu0 0
    %367 = vmatpush1.bf16.msra.mxu0 %v356
    %368 = vmatprep.subr.bf16.mxu0 0
    %369 = vmatpush1.bf16.msra.mxu0 %v357
    %370 = vmatprep.subr.bf16.mxu0 0
    %371 = vmatpush1.bf16.msra.mxu0 0
    %372 = vmatprep.subr.bf16.mxu0 0
    %373 = vmatpush1.bf16.msra.mxu0 0
    %374 = vmatprep.subr.bf16.mxu0 0
    %375 = vmatpush1.bf16.msra.mxu0 0
    %376 = vmatprep.subr.bf16.mxu0 0
    %377 = vmatpush1.bf16.msra.mxu0 0
    %378 = vmatprep.subr.bf16.mxu0 0
    %379 = vmatpush1.bf16.msra.mxu0 0
    %380 = vmatprep.subr.bf16.mxu0 0
    %381 = vmatpush1.bf16.msra.mxu0 0
    %382 = vmatprep.subr.bf16.mxu0 0
    %383 = vmatpush1.bf16.msra.mxu0 0
    %384 = vmatprep.subr.bf16.mxu0 0
    %385 = vmatpush1.bf16.msra.mxu0 0
    %386 = vmatprep.subr.bf16.mxu0 0
    %387 = vmatpush1.bf16.msra.mxu0 0
    %388 = vmatprep.subr.bf16.mxu0 0
    %389 = vmatpush1.bf16.msra.mxu0 0
    %390 = vmatprep.subr.bf16.mxu0 0
    %391 = vmatpush1.bf16.msra.mxu0 0
    %392 = vmatprep.subr.bf16.mxu0 0
    %393 = vmatpush1.bf16.msra.mxu0 0
    %394 = vmatprep.mubr.bf16.mxu0 0
    %395 = vmatmul.mubr.bf16.gmra.mrb[0].mxu0 %v214
    %v396 = vpop.f32.mrb[0].mxu0
    %v397 = vadd.f32 %v179, %v396
    %v398 = vpop.f32.mrb[0].mxu0
    %v399 = vpop.f32.mrb[0].mxu0
    %v400 = vpop.f32.mrb[0].mxu0
    %401 = vdwg.mxu0
    %s402 = scalar_lea.vmem %s1, 96
    %v403 = vld [vmem:[%s402] sm:$0xf]
    %v404 = vld [vmem:[%s402 + $0x4] sm:$0xf]
    %v405 = vld [vmem:[%s402 + $0x8] sm:$0xf]
    %v406 = vld [vmem:[%s402 + $0xc] sm:$0xf]
    %v407 = vld [vmem:[%s402 + $0x10] sm:$0xf]
    %v408 = vld [vmem:[%s402 + $0x14] sm:$0xf]
    %v409 = vld [vmem:[%s402 + $0x18] sm:$0xf]
    %v410 = vld [vmem:[%s402 + $0x1c] sm:$0xf]
    %v419 = vunpack.c.l.b16 %v403
    %v420 = vunpack.c.l.b16 %v404
    %v421 = vunpack.c.l.b16 %v405
    %v422 = vunpack.c.l.b16 %v406
    %v423 = vunpack.c.l.b16 %v407
    %v424 = vunpack.c.l.b16 %v408
    %v425 = vunpack.c.l.b16 %v409
    %v426 = vunpack.c.l.b16 %v410
    %v427 = vpack.c.b16 %v420, %v419
    %v428 = vpack.c.b16 %v422, %v421
    %v429 = vpack.c.b16 %v424, %v423
    %v430 = vpack.c.b16 %v426, %v425
    %435 = vmatprep.subr.bf16.mxu0 0
    %436 = vmatpush1.bf16.msra.mxu0 %v427
    %437 = vmatprep.subr.bf16.mxu0 0
    %438 = vmatpush1.bf16.msra.mxu0 %v428
    %439 = vmatprep.subr.bf16.mxu0 0
    %440 = vmatpush1.bf16.msra.mxu0 %v429
    %441 = vmatprep.subr.bf16.mxu0 0
    %442 = vmatpush1.bf16.msra.mxu0 %v430
    %443 = vmatprep.subr.bf16.mxu0 0
    %444 = vmatpush1.bf16.msra.mxu0 0
    %445 = vmatprep.subr.bf16.mxu0 0
    %446 = vmatpush1.bf16.msra.mxu0 0
    %447 = vmatprep.subr.bf16.mxu0 0
    %448 = vmatpush1.bf16.msra.mxu0 0
    %449 = vmatprep.subr.bf16.mxu0 0
    %450 = vmatpush1.bf16.msra.mxu0 0
    %451 = vmatprep.subr.bf16.mxu0 0
    %452 = vmatpush1.bf16.msra.mxu0 0
    %453 = vmatprep.subr.bf16.mxu0 0
    %454 = vmatpush1.bf16.msra.mxu0 0
    %455 = vmatprep.subr.bf16.mxu0 0
    %456 = vmatpush1.bf16.msra.mxu0 0
    %457 = vmatprep.subr.bf16.mxu0 0
    %458 = vmatpush1.bf16.msra.mxu0 0
    %459 = vmatprep.subr.bf16.mxu0 0
    %460 = vmatpush1.bf16.msra.mxu0 0
    %461 = vmatprep.subr.bf16.mxu0 0
    %462 = vmatpush1.bf16.msra.mxu0 0
    %463 = vmatprep.subr.bf16.mxu0 0
    %464 = vmatpush1.bf16.msra.mxu0 0
    %465 = vmatprep.subr.bf16.mxu0 0
    %466 = vmatpush1.bf16.msra.mxu0 0
    %467 = vmatprep.mubr.bf16.mxu0 0
    %468 = vmatmul.mubr.bf16.gmra.mrb[0].mxu0 %v214
    %v469 = vpop.f32.mrb[0].mxu0
    %v470 = vadd.f32 %v179, %v469
    %v471 = vpop.f32.mrb[0].mxu0
    %v472 = vpop.f32.mrb[0].mxu0
    %v473 = vpop.f32.mrb[0].mxu0
    %474 = vdwg.mxu0
    %s475 = scalar_lea.vmem %s1, 128
    %v476 = vld [vmem:[%s475] sm:$0xf]
    %v477 = vld [vmem:[%s475 + $0x4] sm:$0xf]
    %v478 = vld [vmem:[%s475 + $0x8] sm:$0xf]
    %v479 = vld [vmem:[%s475 + $0xc] sm:$0xf]
    %v480 = vld [vmem:[%s475 + $0x10] sm:$0xf]
    %v481 = vld [vmem:[%s475 + $0x14] sm:$0xf]
    %v482 = vld [vmem:[%s475 + $0x18] sm:$0xf]
    %v483 = vld [vmem:[%s475 + $0x1c] sm:$0xf]
    %v492 = vunpack.c.l.b16 %v476
    %v493 = vunpack.c.l.b16 %v477
    %v494 = vunpack.c.l.b16 %v478
    %v495 = vunpack.c.l.b16 %v479
    %v496 = vunpack.c.l.b16 %v480
    %v497 = vunpack.c.l.b16 %v481
    %v498 = vunpack.c.l.b16 %v482
    %v499 = vunpack.c.l.b16 %v483
    %v500 = vpack.c.b16 %v493, %v492
    %v501 = vpack.c.b16 %v495, %v494
    %v502 = vpack.c.b16 %v497, %v496
    %v503 = vpack.c.b16 %v499, %v498
    %508 = vmatprep.subr.bf16.mxu0 0
    %509 = vmatpush1.bf16.msra.mxu0 %v500
    %510 = vmatprep.subr.bf16.mxu0 0
    %511 = vmatpush1.bf16.msra.mxu0 %v501
    %512 = vmatprep.subr.bf16.mxu0 0
    %513 = vmatpush1.bf16.msra.mxu0 %v502
    %514 = vmatprep.subr.bf16.mxu0 0
    %515 = vmatpush1.bf16.msra.mxu0 %v503
    %516 = vmatprep.subr.bf16.mxu0 0
    %517 = vmatpush1.bf16.msra.mxu0 0
    %518 = vmatprep.subr.bf16.mxu0 0
    %519 = vmatpush1.bf16.msra.mxu0 0
    %520 = vmatprep.subr.bf16.mxu0 0
    %521 = vmatpush1.bf16.msra.mxu0 0
    %522 = vmatprep.subr.bf16.mxu0 0
    %523 = vmatpush1.bf16.msra.mxu0 0
    %524 = vmatprep.subr.bf16.mxu0 0
    %525 = vmatpush1.bf16.msra.mxu0 0
    %526 = vmatprep.subr.bf16.mxu0 0
    %527 = vmatpush1.bf16.msra.mxu0 0
    %528 = vmatprep.subr.bf16.mxu0 0
    %529 = vmatpush1.bf16.msra.mxu0 0
    %530 = vmatprep.subr.bf16.mxu0 0
    %531 = vmatpush1.bf16.msra.mxu0 0
    %532 = vmatprep.subr.bf16.mxu0 0
    %533 = vmatpush1.bf16.msra.mxu0 0
    %534 = vmatprep.subr.bf16.mxu0 0
    %535 = vmatpush1.bf16.msra.mxu0 0
    %536 = vmatprep.subr.bf16.mxu0 0
    %537 = vmatpush1.bf16.msra.mxu0 0
    %538 = vmatprep.subr.bf16.mxu0 0
    %539 = vmatpush1.bf16.msra.mxu0 0
    %540 = vmatprep.mubr.bf16.mxu0 0
    %541 = vmatmul.mubr.bf16.gmra.mrb[0].mxu0 %v214
    %v542 = vpop.f32.mrb[0].mxu0
    %v543 = vadd.f32 %v179, %v542
    %v544 = vpop.f32.mrb[0].mxu0
    %v545 = vpop.f32.mrb[0].mxu0
    %v546 = vpop.f32.mrb[0].mxu0
    %547 = vdwg.mxu0
    %s548 = scalar_lea.vmem %s1, 160
    %v549 = vld [vmem:[%s548] sm:$0xf]
    %v550 = vld [vmem:[%s548 + $0x4] sm:$0xf]
    %v551 = vld [vmem:[%s548 + $0x8] sm:$0xf]
    %v552 = vld [vmem:[%s548 + $0xc] sm:$0xf]
    %v553 = vld [vmem:[%s548 + $0x10] sm:$0xf]
    %v554 = vld [vmem:[%s548 + $0x14] sm:$0xf]
    %v555 = vld [vmem:[%s548 + $0x18] sm:$0xf]
    %v556 = vld [vmem:[%s548 + $0x1c] sm:$0xf]
    %v565 = vunpack.c.l.b16 %v549
    %v566 = vunpack.c.l.b16 %v550
    %v567 = vunpack.c.l.b16 %v551
    %v568 = vunpack.c.l.b16 %v552
    %v569 = vunpack.c.l.b16 %v553
    %v570 = vunpack.c.l.b16 %v554
    %v571 = vunpack.c.l.b16 %v555
    %v572 = vunpack.c.l.b16 %v556
    %v573 = vpack.c.b16 %v566, %v565
    %v574 = vpack.c.b16 %v568, %v567
    %v575 = vpack.c.b16 %v570, %v569
    %v576 = vpack.c.b16 %v572, %v571
    %581 = vmatprep.subr.bf16.mxu0 0
    %582 = vmatpush1.bf16.msra.mxu0 %v573
    %583 = vmatprep.subr.bf16.mxu0 0
    %584 = vmatpush1.bf16.msra.mxu0 %v574
    %585 = vmatprep.subr.bf16.mxu0 0
    %586 = vmatpush1.bf16.msra.mxu0 %v575
    %587 = vmatprep.subr.bf16.mxu0 0
    %588 = vmatpush1.bf16.msra.mxu0 %v576
    %589 = vmatprep.subr.bf16.mxu0 0
    %590 = vmatpush1.bf16.msra.mxu0 0
    %591 = vmatprep.subr.bf16.mxu0 0
    %592 = vmatpush1.bf16.msra.mxu0 0
    %593 = vmatprep.subr.bf16.mxu0 0
    %594 = vmatpush1.bf16.msra.mxu0 0
    %595 = vmatprep.subr.bf16.mxu0 0
    %596 = vmatpush1.bf16.msra.mxu0 0
    %597 = vmatprep.subr.bf16.mxu0 0
    %598 = vmatpush1.bf16.msra.mxu0 0
    %599 = vmatprep.subr.bf16.mxu0 0
    %600 = vmatpush1.bf16.msra.mxu0 0
    %601 = vmatprep.subr.bf16.mxu0 0
    %602 = vmatpush1.bf16.msra.mxu0 0
    %603 = vmatprep.subr.bf16.mxu0 0
    %604 = vmatpush1.bf16.msra.mxu0 0
    %605 = vmatprep.subr.bf16.mxu0 0
    %606 = vmatpush1.bf16.msra.mxu0 0
    %607 = vmatprep.subr.bf16.mxu0 0
    %608 = vmatpush1.bf16.msra.mxu0 0
    %609 = vmatprep.subr.bf16.mxu0 0
    %610 = vmatpush1.bf16.msra.mxu0 0
    %611 = vmatprep.subr.bf16.mxu0 0
    %612 = vmatpush1.bf16.msra.mxu0 0
    %613 = vmatprep.mubr.bf16.mxu0 0
    %614 = vmatmul.mubr.bf16.gmra.mrb[0].mxu0 %v214
    %v615 = vpop.f32.mrb[0].mxu0
    %v616 = vadd.f32 %v179, %v615
    %v617 = vpop.f32.mrb[0].mxu0
    %v618 = vpop.f32.mrb[0].mxu0
    %v619 = vpop.f32.mrb[0].mxu0
    %620 = vdwg.mxu0
    %s621 = scalar_lea.vmem %s1, 192
    %v622 = vld [vmem:[%s621] sm:$0xf]
    %v623 = vld [vmem:[%s621 + $0x4] sm:$0xf]
    %v624 = vld [vmem:[%s621 + $0x8] sm:$0xf]
    %v625 = vld [vmem:[%s621 + $0xc] sm:$0xf]
    %v626 = vld [vmem:[%s621 + $0x10] sm:$0xf]
    %v627 = vld [vmem:[%s621 + $0x14] sm:$0xf]
    %v628 = vld [vmem:[%s621 + $0x18] sm:$0xf]
    %v629 = vld [vmem:[%s621 + $0x1c] sm:$0xf]
    %v638 = vunpack.c.l.b16 %v622
    %v639 = vunpack.c.l.b16 %v623
    %v640 = vunpack.c.l.b16 %v624
    %v641 = vunpack.c.l.b16 %v625
    %v642 = vunpack.c.l.b16 %v626
    %v643 = vunpack.c.l.b16 %v627
    %v644 = vunpack.c.l.b16 %v628
    %v645 = vunpack.c.l.b16 %v629
    %v646 = vpack.c.b16 %v639, %v638
    %v647 = vpack.c.b16 %v641, %v640
    %v648 = vpack.c.b16 %v643, %v642
    %v649 = vpack.c.b16 %v645, %v644
    %654 = vmatprep.subr.bf16.mxu0 0
    %655 = vmatpush1.bf16.msra.mxu0 %v646
    %656 = vmatprep.subr.bf16.mxu0 0
    %657 = vmatpush1.bf16.msra.mxu0 %v647
    %658 = vmatprep.subr.bf16.mxu0 0
    %659 = vmatpush1.bf16.msra.mxu0 %v648
    %660 = vmatprep.subr.bf16.mxu0 0
    %661 = vmatpush1.bf16.msra.mxu0 %v649
    %662 = vmatprep.subr.bf16.mxu0 0
    %663 = vmatpush1.bf16.msra.mxu0 0
    %664 = vmatprep.subr.bf16.mxu0 0
    %665 = vmatpush1.bf16.msra.mxu0 0
    %666 = vmatprep.subr.bf16.mxu0 0
    %667 = vmatpush1.bf16.msra.mxu0 0
    %668 = vmatprep.subr.bf16.mxu0 0
    %669 = vmatpush1.bf16.msra.mxu0 0
    %670 = vmatprep.subr.bf16.mxu0 0
    %671 = vmatpush1.bf16.msra.mxu0 0
    %672 = vmatprep.subr.bf16.mxu0 0
    %673 = vmatpush1.bf16.msra.mxu0 0
    %674 = vmatprep.subr.bf16.mxu0 0
    %675 = vmatpush1.bf16.msra.mxu0 0
    %676 = vmatprep.subr.bf16.mxu0 0
    %677 = vmatpush1.bf16.msra.mxu0 0
    %678 = vmatprep.subr.bf16.mxu0 0
    %679 = vmatpush1.bf16.msra.mxu0 0
    %680 = vmatprep.subr.bf16.mxu0 0
    %681 = vmatpush1.bf16.msra.mxu0 0
    %682 = vmatprep.subr.bf16.mxu0 0
    %683 = vmatpush1.bf16.msra.mxu0 0
    %684 = vmatprep.subr.bf16.mxu0 0
    %685 = vmatpush1.bf16.msra.mxu0 0
    %686 = vmatprep.mubr.bf16.mxu0 0
    %687 = vmatmul.mubr.bf16.gmra.mrb[0].mxu0 %v214
    %v688 = vpop.f32.mrb[0].mxu0
    %v689 = vadd.f32 %v179, %v688
    %v690 = vpop.f32.mrb[0].mxu0
    %v691 = vpop.f32.mrb[0].mxu0
    %v692 = vpop.f32.mrb[0].mxu0
    %693 = vdwg.mxu0
    %s694 = scalar_lea.vmem %s1, 224
    %v695 = vld [vmem:[%s694] sm:$0xf]
    %v696 = vld [vmem:[%s694 + $0x4] sm:$0xf]
    %v697 = vld [vmem:[%s694 + $0x8] sm:$0xf]
    %v698 = vld [vmem:[%s694 + $0xc] sm:$0xf]
    %v699 = vld [vmem:[%s694 + $0x10] sm:$0xf]
    %v700 = vld [vmem:[%s694 + $0x14] sm:$0xf]
    %v701 = vld [vmem:[%s694 + $0x18] sm:$0xf]
    %v702 = vld [vmem:[%s694 + $0x1c] sm:$0xf]
    %v711 = vunpack.c.l.b16 %v695
    %v712 = vunpack.c.l.b16 %v696
    %v713 = vunpack.c.l.b16 %v697
    %v714 = vunpack.c.l.b16 %v698
    %v715 = vunpack.c.l.b16 %v699
    %v716 = vunpack.c.l.b16 %v700
    %v717 = vunpack.c.l.b16 %v701
    %v718 = vunpack.c.l.b16 %v702
    %v719 = vpack.c.b16 %v712, %v711
    %v720 = vpack.c.b16 %v714, %v713
    %v721 = vpack.c.b16 %v716, %v715
    %v722 = vpack.c.b16 %v718, %v717
    %727 = vmatprep.subr.bf16.mxu0 0
    %728 = vmatpush1.bf16.msra.mxu0 %v719
    %729 = vmatprep.subr.bf16.mxu0 0
    %730 = vmatpush1.bf16.msra.mxu0 %v720
    %731 = vmatprep.subr.bf16.mxu0 0
    %732 = vmatpush1.bf16.msra.mxu0 %v721
    %733 = vmatprep.subr.bf16.mxu0 0
    %734 = vmatpush1.bf16.msra.mxu0 %v722
    %735 = vmatprep.subr.bf16.mxu0 0
    %736 = vmatpush1.bf16.msra.mxu0 0
    %737 = vmatprep.subr.bf16.mxu0 0
    %738 = vmatpush1.bf16.msra.mxu0 0
    %739 = vmatprep.subr.bf16.mxu0 0
    %740 = vmatpush1.bf16.msra.mxu0 0
    %741 = vmatprep.subr.bf16.mxu0 0
    %742 = vmatpush1.bf16.msra.mxu0 0
    %743 = vmatprep.subr.bf16.mxu0 0
    %744 = vmatpush1.bf16.msra.mxu0 0
    %745 = vmatprep.subr.bf16.mxu0 0
    %746 = vmatpush1.bf16.msra.mxu0 0
    %747 = vmatprep.subr.bf16.mxu0 0
    %748 = vmatpush1.bf16.msra.mxu0 0
    %749 = vmatprep.subr.bf16.mxu0 0
    %750 = vmatpush1.bf16.msra.mxu0 0
    %751 = vmatprep.subr.bf16.mxu0 0
    %752 = vmatpush1.bf16.msra.mxu0 0
    %753 = vmatprep.subr.bf16.mxu0 0
    %754 = vmatpush1.bf16.msra.mxu0 0
    %755 = vmatprep.subr.bf16.mxu0 0
    %756 = vmatpush1.bf16.msra.mxu0 0
    %757 = vmatprep.subr.bf16.mxu0 0
    %758 = vmatpush1.bf16.msra.mxu0 0
    %759 = vmatprep.mubr.bf16.mxu0 0
    %760 = vmatmul.mubr.bf16.gmra.mrb[0].mxu0 %v214
    %v761 = vpop.f32.mrb[0].mxu0
    %v762 = vadd.f32 %v179, %v761
    %v763 = vpop.f32.mrb[0].mxu0
    %v764 = vpop.f32.mrb[0].mxu0
    %v765 = vpop.f32.mrb[0].mxu0
    %766 = vdwg.mxu0
    %v768 = vrot.slane %v324, 4
    %v771 = vrot.slane %v470, 4
    %v774 = vrot.slane %v616, 4
    %v777 = vrot.slane %v762, 4
    %vm779 = vcmask 1043456
    %v780 = vsel %vm779, %v251, %v768
    %v781 = vsel %vm779, %v397, %v771
    %v782 = vsel %vm779, %v543, %v774
    %v783 = vsel %vm779, %v689, %v777
    %785 = vset.pattern.permute.xlu0 0
    %786 = vperm.xlu0 %785, %v36
    %v787 = vpop.permute.xlu0 %786
    %790 = vset.pattern.permute.xlu0 0
    %791 = vperm.xlu0 %790, %v37
    %v792 = vpop.permute.xlu0 %791
    %795 = vset.pattern.permute.xlu0 0
    %796 = vperm.xlu0 %795, %v38
    %v797 = vpop.permute.xlu0 %796
    %800 = vset.pattern.permute.xlu0 0
    %801 = vperm.xlu0 %800, %v39
    %v802 = vpop.permute.xlu0 %801
    %v804 = vmul.f32 %v780, %v787
    %v805 = vmul.f32 %v781, %v792
    %v806 = vmul.f32 %v782, %v797
    %v807 = vmul.f32 %v783, %v802
    %v808 = vmax.f32 %v804, 0.0
    %v809 = vmax.f32 %v805, 0.0
    %v810 = vmax.f32 %v806, 0.0
    %v811 = vmax.f32 %v807, 0.0
    %v812 = vand.u32 2147483647, %v804
    %v813 = vand.u32 2147483647, %v805
    %v814 = vand.u32 2147483647, %v806
    %v815 = vand.u32 2147483647, %v807
    %v816 = vsub.f32 0.0, %v812
    %v817 = vsub.f32 0.0, %v813
    %v818 = vsub.f32 0.0, %v814
    %v819 = vsub.f32 0.0, %v815
    %v820 = vmul.f32 %v816, 1.442695
    %v821 = vpow.pop %v820
    %v822 = vmul.f32 %v817, 1.442695
    %v823 = vpow.pop %v822
    %v824 = vmul.f32 %v818, 1.442695
    %v825 = vpow.pop %v824
    %v826 = vmul.f32 %v819, 1.442695
    %v827 = vpow.pop %v826
    %v828 = vadd.f32 %v821, 1.0
    %v829 = vadd.f32 %v823, 1.0
    %v830 = vadd.f32 %v825, 1.0
    %v831 = vadd.f32 %v827, 1.0
    %v832 = vlog2.pop %v828
    %v833 = vmul.f32 %v832, 0.6931472
    %v834 = vlog2.pop %v829
    %v835 = vmul.f32 %v834, 0.6931472
    %v836 = vlog2.pop %v830
    %v837 = vmul.f32 %v836, 0.6931472
    %v838 = vlog2.pop %v831
    %v839 = vmul.f32 %v838, 0.6931472
    %v840 = vadd.f32 %v808, %v833
    %v841 = vadd.f32 %v809, %v835
    %v842 = vadd.f32 %v810, %v837
    %v843 = vadd.f32 %v811, %v839
    %845 = vset.pattern.permute.xlu0 0
    %846 = vperm.xlu0 %845, %v32
    %v847 = vpop.permute.xlu0 %846
    %850 = vset.pattern.permute.xlu0 0
    %851 = vperm.xlu0 %850, %v33
    %v852 = vpop.permute.xlu0 %851
    %855 = vset.pattern.permute.xlu0 0
    %856 = vperm.xlu0 %855, %v34
    %v857 = vpop.permute.xlu0 %856
    %860 = vset.pattern.permute.xlu0 0
    %861 = vperm.xlu0 %860, %v35
    %v862 = vpop.permute.xlu0 %861
    %v864 = vmul.f32 %v847, %v840
    %v865 = vmul.f32 %v852, %v841
    %v866 = vmul.f32 %v857, %v842
    %v867 = vmul.f32 %v862, %v843
    %v868 = vld [vmem:[#allocation5] sm:$0x1]
    %vm869 = vcmask 64512
    %v870 = vsel %vm869, %v864, 0.0
    %v871 = vsel %vm869, %v865, 0.0
    %v872 = vadd.f32 %v870, %v871
    %v873 = vsel %vm869, %v866, 0.0
    %v874 = vadd.f32 %v872, %v873
    %v875 = vsel %vm869, %v867, 0.0
    %v876 = vadd.f32 %v874, %v875
    %v877 = vrot.slane %v876, 4
    %v878 = vadd.f32 %v876, %v877
    %v879 = vrot.slane %v878, 2
    %v880 = vadd.f32 %v878, %v879
    %v881 = vrot.slane %v880, 1
    %v882 = vadd.f32 %v880, %v881
    %v883 = vadd.f32 %v868, %v882
    %vm884 = vcmask 57344
    %885 = vst.msk [vmem:[#allocation5] sm:$0x1] %vm884, %v883
    // Predicated region
    $region34: #{dynemb_forward.1} parent=1 // pred_check
      %p886 = pneg %p40
    $region35: #{dynemb_forward.1} parent=1 // pred_check_branch
      %888 = sbr.rel (%p886) target = $region37
    $region36: #{dynemb_forward.1} parent=1 // pred_region
      %v889 = vld [vmem:[#allocation5] sm:$0x1]
      %v890 = vmul.f32 %v889, 0.125
      %891 = vst.msk [vmem:[#allocation5] sm:$0x1] %vm884, %v890
    $region37: #{dynemb_forward.1} parent=1 // pred_fallthru
      _
    // Predicated region
    $region38: #{dynemb_forward.1} parent=1 // pred_check
      _
    $region39: #{dynemb_forward.1} parent=1 // pred_check_branch
      %893 = sbr.rel (0) target = $region41
    $region40: #{dynemb_forward.1} parent=1 // pred_region
      %s895 = ssub.s32 16, 16
      %896 = vsyncadd [#allocation4], %s895
      %s898 = sshll.u32 [#allocation3], 4
      %s899 = int_to_ptr.vmem [resolvable:$true] %s898
      %901 = dma.vmem_to_hbm [thread:$0]  %s899, 16, %s7, [#allocation4]
    $region41: #{dynemb_forward.1} parent=1 // pred_fallthru
      _
    // Predicated region
    $region42: #{dynemb_forward.1} parent=1 // pred_check
      _
    $region43: #{dynemb_forward.1} parent=1 // pred_check_branch
      %903 = sbr.rel (0) target = $region45
    $region44: #{dynemb_forward.1} parent=1 // pred_region
      %s905 = ssub.s32 16, 16
      %906 = vsyncadd [#allocation6], %s905
      %s908 = sshll.u32 [#allocation5], 4
      %s909 = int_to_ptr.vmem [resolvable:$true] %s908
      %911 = dma.vmem_to_hbm [thread:$0]  %s909, 16, %s8, [#allocation6]
    $region45: #{dynemb_forward.1} parent=1 // pred_fallthru
      _
    // Predicated region
    $region46: #{dynemb_forward.1} parent=1 // pred_check
      _
    $region47: #{dynemb_forward.1} parent=1 // pred_check_branch
      %913 = sbr.rel (0) target = $region49
    $region48: #{dynemb_forward.1} parent=1 // pred_region
      %914 = dma.done [#allocation4], 16
    $region49: #{dynemb_forward.1} parent=1 // pred_fallthru
      _
    // Predicated region
    $region50: #{dynemb_forward.1} parent=1 // pred_check
      _
    $region51: #{dynemb_forward.1} parent=1 // pred_check_branch
      %916 = sbr.rel (0) target = $region53
    $region52: #{dynemb_forward.1} parent=1 // pred_region
      %917 = dma.done [#allocation6], 16
    $region53: #{dynemb_forward.1} parent=1 // pred_fallthru
      _
    %918 = vsyncpa [#allocation4], 1
    %919 = vsyncpa [#allocation6], 1

</llo_original>
